<compile_context>
chip_gen: v7x
topology: tpu7x:2x2x1
jax: 0.10.0
libtpu: 0.0.40
codegen_flags: <defaults>
</compile_context>

<pallas_src>
import functools

import jax
import jax.numpy as jnp
from jax import lax
from jax.experimental import pallas as pl
from jax.experimental.pallas import tpu as pltpu


def _basic_conv_kernel(x_ref, w_ref, b_ref, o_ref, *,
                       K, stride, TH, Wo, act, use_im2col):
    # x_ref : (1, Cin, th_in, Wp)   one input row-tile (halo included), mm_dtype
    # w_ref : (Cout_p, K*K*Cin)     conv weight with BN scale folded in, mm_dtype
    # b_ref : (Cout_p, 1)           folded BN (eval mode) bias, f32
    # o_ref : (1, Cout_p, TH*Wo)    one row-tile of the NCHW output, flattened
    Cin = x_ref.shape[1]
    xt = x_ref[0]                                          # (Cin, th_in, Wp)

    taps = []
    for kh in range(K):
        for kw in range(K):
            p = lax.slice(
                xt,
                start_indices=(0, kh, kw),
                limit_indices=(Cin, kh + stride * (TH - 1) + 1,
                               kw + stride * (Wo - 1) + 1),
                strides=(1, stride, stride))               # (Cin, TH, Wo)
            taps.append(p)

    if use_im2col:
        # One weight-stationary MXU matmul over the fused im2col operand,
        # built directly in the matmul dtype (no extra f32 copy).
        col = jnp.concatenate(taps, axis=0).reshape(K * K * Cin, TH * Wo)
        acc = jnp.dot(w_ref[...], col, preferred_element_type=jnp.float32)
    else:
        # Large Cin: per-tap dots already fill the MXU contraction tile;
        # skip im2col materialization entirely.
        w = w_ref[...]
        acc = jnp.zeros((w.shape[0], TH * Wo), jnp.float32)
        for i, p in enumerate(taps):
            acc = acc + jnp.dot(w[:, i * Cin:(i + 1) * Cin],
                                p.reshape(Cin, TH * Wo),
                                preferred_element_type=jnp.float32)

    # BN (eval) epilogue: scale already folded into the weights, only + bias.
    y = acc + b_ref[...]

    if act == 'mish':
        # Mish = y * tanh(softplus(y)); single-exp stable form.
        # One VALU select on the ratio, two EUP approx reciprocals (free slot).
        e = jnp.exp(-jnp.abs(y))
        e2 = e * e
        r_pos = (1.0 + 2.0 * e) * pl.reciprocal(1.0 + 2.0 * e + 2.0 * e2,
                                                approx=True)
        r_neg = (2.0 * e + e2) * pl.reciprocal(2.0 + 2.0 * e + e2,
                                               approx=True)
        y = y * jnp.where(y >= 0.0, r_pos, r_neg)
    else:
        # LeakyReLU(0.1)
        y = jnp.where(y >= 0.0, y, 0.1 * y)

    o_ref[...] = y[None].astype(o_ref.dtype)


def _vmem_capacity_bytes():
    """Generation-aware VMEM capacity (fallback is safe for all chips)."""
    try:
        info = pltpu.get_tpu_info()
        cap = getattr(info, "vmem_capacity_bytes", None)
        if cap:
            return int(cap)
    except Exception:
        pass
    return 64 << 20          # conservative: v7x per-core VMEM


def _footprint(th, Wo, Wp, Cin, Cout_p, K, stride, mm_itemsize, out_itemsize,
               use_im2col):
    """Rough per-grid-step VMEM footprint (bytes) for an output row tile th."""
    th_in = stride * (th - 1) + K
    in_blk = 2 * Cin * th_in * Wp * mm_itemsize        # double-buffered input tile
    w_blk = 2 * Cout_p * K * K * Cin * mm_itemsize     # weights (conservative x2)
    out_blk = 2 * Cout_p * th * Wo * out_itemsize      # double-buffered output tile
    acc = Cout_p * th * Wo * 4                         # f32 accumulator
    if use_im2col:
        col = 2 * K * K * Cin * th * Wo * mm_itemsize  # im2col (+ relayout copy)
    else:
        col = 2 * Cin * th * Wo * mm_itemsize          # one tap slab at a time
    epi = 3 * Cout_p * th * Wo * 4                     # activation temporaries
    return in_blk + w_blk + out_blk + acc + col + epi


def _pick_row_tile(Ho, Wo, Wp, Cin, Cout_p, K, stride, mm_itemsize,
                   out_itemsize, use_im2col, budget_bytes, n_batch,
                   min_grid_steps):
    """Largest output-row tile TH dividing Ho that (in priority order) keeps
    TH*Wo 128-lane aligned, leaves >= min_grid_steps grid steps (megacore),
    and fits the per-step VMEM budget."""
    divisors = [th for th in range(1, Ho + 1) if Ho % th == 0]

    def fits(th):
        return _footprint(th, Wo, Wp, Cin, Cout_p, K, stride, mm_itemsize,
                          out_itemsize, use_im2col) <= budget_bytes

    def lane_ok(th):
        return (th * Wo) % 128 == 0

    def steps_ok(th):
        return n_batch * (Ho // th) >= min_grid_steps

    for pred in ((lambda th: fits(th) and lane_ok(th) and steps_ok(th)),
                 (lambda th: fits(th) and lane_ok(th)),
                 (lambda th: fits(th) and steps_ok(th)),
                 fits):
        cands = [th for th in divisors if pred(th)]
        if cands:
            return max(cands)
    return 1


def basic_conv(x_nchw, weight_oihw, gamma, beta, running_mean, running_var,
               *, stride=1, eps=1e-5, act='mish',
               matmul_dtype=jnp.bfloat16, row_tile_budget_bytes=None,
               min_grid_steps=4):
    """Pallas implementation of BasicConv.forward (NCHW in / NCHW out)."""
    N, Cin, H, W = x_nchw.shape
    Cout, _, K, _ = weight_oihw.shape
    pad = K // 2
    Ho = (H + 2 * pad - K) // stride + 1
    Wo = (W + 2 * pad - K) // stride + 1
    Wp = W + 2 * pad

    out_dtype = x_nchw.dtype
    mm_dtype = out_dtype if matmul_dtype is None else jnp.dtype(matmul_dtype)
    mm_itemsize = jnp.dtype(mm_dtype).itemsize
    out_itemsize = jnp.dtype(out_dtype).itemsize

    # Pad Cout to a sublane multiple so output stores are unmasked.
    Cout_p = ((Cout + 7) // 8) * 8
    # Per-tap accumulation once Cin alone fills the MXU contraction tile.
    use_im2col = Cin < 256

    # Generation-aware VMEM budgeting.
    vmem_cap = _vmem_capacity_bytes()
    if row_tile_budget_bytes is None:
        row_tile_budget_bytes = vmem_cap // 5

    TH = _pick_row_tile(Ho, Wo, Wp, Cin, Cout_p, K, stride,
                        mm_itemsize, out_itemsize, use_im2col,
                        row_tile_budget_bytes, N, min_grid_steps)
    n_tiles = Ho // TH
    th_in = stride * (TH - 1) + K

    # ---- wrapper-side layout plumbing (fusible by XLA) ----
    # TODO(synk): the spatial zero-pad could be fused into the kernel with
    # masked edge taps to save one HBM pass (matters most on v5e).
    xp = jnp.pad(x_nchw.astype(mm_dtype),
                 ((0, 0), (0, 0), (pad, pad), (pad, pad)))   # (N, Cin, Hp, Wp)
    # Overlapping row windows (halo included) so the kernel's input block is
    # O(Cin*th_in*Wp) instead of the whole padded image.
    row_idx = ((jnp.arange(n_tiles) * (TH * stride))[:, None]
               + jnp.arange(th_in)[None, :])                 # (n_tiles, th_in)
    x_tiles = xp[:, :, row_idx, :]                           # (N,Cin,n_tiles,th_in,Wp)
    x_tiles = jnp.transpose(x_tiles, (0, 2, 1, 3, 4)).reshape(
        N * n_tiles, Cin, th_in, Wp)

    # Fold eval-mode BatchNorm into a per-channel affine; fold the scale into
    # the conv weights so the kernel epilogue is only `+ bias`.
    # TODO(synk): PyTorch training-mode BN (batch statistics) is not reproduced.
    inv_std = 1.0 / jnp.sqrt(running_var.astype(jnp.float32) + eps)
    scale = gamma.astype(jnp.float32) * inv_std                      # (Cout,)
    bias = (beta.astype(jnp.float32)
            - running_mean.astype(jnp.float32) * scale)              # (Cout,)

    # Weight-stationary LHS: (Cout_p, K*K*Cin), contraction row order (kh,kw,cin).
    w_flat = jnp.transpose(weight_oihw.astype(jnp.float32),
                           (2, 3, 1, 0)).reshape(K * K * Cin, Cout)
    w_packed = (w_flat * scale[None, :]).T                           # (Cout, KKC)
    if Cout_p != Cout:
        w_packed = jnp.concatenate(
            [w_packed, jnp.zeros((Cout_p - Cout, K * K * Cin), jnp.float32)], 0)
        bias = jnp.concatenate(
            [bias, jnp.zeros((Cout_p - Cout,), jnp.float32)], 0)
    w_packed = w_packed.astype(mm_dtype)
    bias = bias.reshape(Cout_p, 1)

    est = _footprint(TH, Wo, Wp, Cin, Cout_p, K, stride,
                     mm_itemsize, out_itemsize, use_im2col)
    vmem_limit = int(min(int(0.9 * vmem_cap), max(32 << 20, 2 * est)))

    kernel = functools.partial(_basic_conv_kernel, K=K, stride=stride,
                               TH=TH, Wo=Wo, act=act, use_im2col=use_im2col)

    # TODO(synk): mark the grid-invariant weight/bias specs single-buffered
    # (pipeline_mode=pl.Buffered(1)) to reclaim their second VMEM buffer on v7x.
    out_flat = pl.pallas_call(
        kernel,
        grid=(N, n_tiles),
        in_specs=[
            pl.BlockSpec((1, Cin, th_in, Wp),
                         lambda n, t: (n * n_tiles + t, 0, 0, 0)),
            pl.BlockSpec((Cout_p, K * K * Cin), lambda n, t: (0, 0)),
            pl.BlockSpec((Cout_p, 1), lambda n, t: (0, 0)),
        ],
        out_specs=pl.BlockSpec((1, Cout_p, TH * Wo), lambda n, t: (n, 0, t)),
        out_shape=jax.ShapeDtypeStruct((N, Cout_p, Ho * Wo), out_dtype),
        compiler_params=pltpu.CompilerParams(
            dimension_semantics=("parallel", "parallel"),
            vmem_limit_bytes=vmem_limit),
    )(x_tiles, w_packed, bias)

    # Contiguous last-dim split -> free reshape; output is NCHW natively.
    out = out_flat.reshape(N, Cout_p, Ho, Wo)
    if Cout_p != Cout:
        out = out[:, :Cout]
    return out


def _ref_basic_conv(x, w, gamma, beta, mean, var, *, stride, eps, act):
    """Pure-JAX reference mirroring the PyTorch module (eval-mode BN)."""
    pad = w.shape[-1] // 2
    y = lax.conv_general_dilated(
        x, w, window_strides=(stride, stride),
        padding=[(pad, pad), (pad, pad)],
        dimension_numbers=('NCHW', 'OIHW', 'NCHW'))
    y = (y - mean[None, :, None, None]) / jnp.sqrt(var[None, :, None, None] + eps)
    y = y * gamma[None, :, None, None] + beta[None, :, None, None]
    if act == 'mish':
        y = y * jnp.tanh(jax.nn.softplus(y))
    else:
        y = jnp.where(y >= 0, y, 0.1 * y)
    return y


if __name__ == "__main__":
    key = jax.random.PRNGKey(0)
    k_x, k_w, k_g, k_b, k_m, k_v = jax.random.split(key, 6)

    # Small shapes consistent with BasicConv(in=4, out=8, kernel_size=3, stride=1).
    N, Cin, H, W = 2, 4, 16, 16
    Cout, K, stride = 8, 3, 1

    x = jax.random.normal(k_x, (N, Cin, H, W), jnp.float32)
    weight = jax.random.normal(k_w, (Cout, Cin, K, K), jnp.float32) * 0.1
    gamma = jax.random.normal(k_g, (Cout,), jnp.float32) * 0.2 + 1.0
    beta = jax.random.normal(k_b, (Cout,), jnp.float32) * 0.1
    running_mean = jax.random.normal(k_m, (Cout,), jnp.float32) * 0.1
    running_var = jax.random.uniform(k_v, (Cout,), jnp.float32, 0.5, 1.5)

    ref_mish = _ref_basic_conv(x, weight, gamma, beta, running_mean, running_var,
                               stride=stride, eps=1e-5, act='mish')
    ref_leaky = _ref_basic_conv(x, weight, gamma, beta, running_mean, running_var,
                                stride=stride, eps=1e-5, act='leaky')

    # 1) f32 MXU path, Mish.
    out_f32 = basic_conv(x, weight, gamma, beta, running_mean, running_var,
                         stride=stride, act='mish', matmul_dtype=jnp.float32)
    out_f32 = jax.block_until_ready(out_f32)
    assert out_f32.shape == ref_mish.shape == (N, Cout, H, W)
    assert jnp.allclose(out_f32, ref_mish, rtol=5e-3, atol=5e-3), \
        "mish/f32 mismatch vs reference"

    # 2) bf16 MXU path (default; f32 accumulation), Mish.
    out_bf16 = basic_conv(x, weight, gamma, beta, running_mean, running_var,
                          stride=stride, act='mish', matmul_dtype=jnp.bfloat16)
    out_bf16 = jax.block_until_ready(out_bf16)
    assert jnp.allclose(out_bf16, ref_mish, rtol=3e-2, atol=3e-2), \
        "mish/bf16 mismatch vs reference"

    # 3) LeakyReLU branch, f32.
    out_lk = basic_conv(x, weight, gamma, beta, running_mean, running_var,
                        stride=stride, act='leaky', matmul_dtype=jnp.float32)
    out_lk = jax.block_until_ready(out_lk)
    assert jnp.allclose(out_lk, ref_leaky, rtol=2e-3, atol=2e-3), \
        "leaky mismatch vs reference"

    print("KERNEL_OK")
</pallas_src>

<mosaic_0001>
module attributes {stable_mosaic.version = 11 : i64} {
  func.func @_basic_conv_kernel(%arg0: i32, %arg1: i32, %arg2: memref<1x4x10x18xf32, #tpu.memory_space<vmem>>, %arg3: memref<8x36xf32, #tpu.memory_space<vmem>>, %arg4: memref<8x1xf32, #tpu.memory_space<vmem>>, %arg5: memref<1x8x128xf32, #tpu.memory_space<vmem>>) attributes {dimension_semantics = [#tpu.dimension_semantics<parallel>, #tpu.dimension_semantics<parallel>], iteration_bounds = array<i64: 2, 2>, scalar_prefetch = 0 : i64, scratch_operands = 0 : i64, tpu.core_type = #tpu.core_type<tc>, window_params = [{transform_indices = @transform_0, window_bounds = array<i64: 1, 4, 10, 18>}, {pipeline_mode = #tpu.pipeline_mode<synchronous>, transform_indices = @transform_1, window_bounds = array<i64: 8, 36>}, {pipeline_mode = #tpu.pipeline_mode<synchronous>, transform_indices = @transform_2, window_bounds = array<i64: 8, 1>}, {transform_indices = @transform_3, window_bounds = array<i64: 1, 8, 128>}]} {
    %c0 = arith.constant 0 : index
    %c0_0 = arith.constant 0 : index
    %c0_1 = arith.constant 0 : index
    %c0_2 = arith.constant 0 : index
    %0 = vector.load %arg2[%c0, %c0_0, %c0_1, %c0_2] : memref<1x4x10x18xf32, #tpu.memory_space<vmem>>, vector<1x4x10x18xf32>
    %1 = vector.shape_cast %0 : vector<1x4x10x18xf32> to vector<4x10x18xf32>
    %2 = vector.extract_strided_slice %1 {offsets = [0, 0, 0], sizes = [4, 8, 16], strides = [1, 1, 1]} : vector<4x10x18xf32> to vector<4x8x16xf32>
    %3 = vector.extract_strided_slice %1 {offsets = [0, 0, 1], sizes = [4, 8, 16], strides = [1, 1, 1]} : vector<4x10x18xf32> to vector<4x8x16xf32>
    %4 = vector.extract_strided_slice %1 {offsets = [0, 0, 2], sizes = [4, 8, 16], strides = [1, 1, 1]} : vector<4x10x18xf32> to vector<4x8x16xf32>
    %5 = vector.extract_strided_slice %1 {offsets = [0, 1, 0], sizes = [4, 8, 16], strides = [1, 1, 1]} : vector<4x10x18xf32> to vector<4x8x16xf32>
    %6 = vector.extract_strided_slice %1 {offsets = [0, 1, 1], sizes = [4, 8, 16], strides = [1, 1, 1]} : vector<4x10x18xf32> to vector<4x8x16xf32>
    %7 = vector.extract_strided_slice %1 {offsets = [0, 1, 2], sizes = [4, 8, 16], strides = [1, 1, 1]} : vector<4x10x18xf32> to vector<4x8x16xf32>
    %8 = vector.extract_strided_slice %1 {offsets = [0, 2, 0], sizes = [4, 8, 16], strides = [1, 1, 1]} : vector<4x10x18xf32> to vector<4x8x16xf32>
    %9 = vector.extract_strided_slice %1 {offsets = [0, 2, 1], sizes = [4, 8, 16], strides = [1, 1, 1]} : vector<4x10x18xf32> to vector<4x8x16xf32>
    %10 = vector.extract_strided_slice %1 {offsets = [0, 2, 2], sizes = [4, 8, 16], strides = [1, 1, 1]} : vector<4x10x18xf32> to vector<4x8x16xf32>
    %11 = tpu.concatenate %2, %3, %4, %5, %6, %7, %8, %9, %10 in 0 : vector<4x8x16xf32>, vector<4x8x16xf32>, vector<4x8x16xf32>, vector<4x8x16xf32>, vector<4x8x16xf32>, vector<4x8x16xf32>, vector<4x8x16xf32>, vector<4x8x16xf32>, vector<4x8x16xf32> -> vector<36x8x16xf32>
    %12 = vector.shape_cast %11 : vector<36x8x16xf32> to vector<36x128xf32>
    %c0_3 = arith.constant 0 : index
    %c0_4 = arith.constant 0 : index
    %13 = vector.load %arg3[%c0_3, %c0_4] : memref<8x36xf32, #tpu.memory_space<vmem>>, vector<8x36xf32>
    %cst = arith.constant dense<0.000000e+00> : vector<8x128xf32>
    %14 = tpu.matmul %13, %12, %cst {dimension_numbers = #tpu.dot_dimension_numbers<[1], [0], [0], [1], [0, 0, 1, 1], [], []>} : vector<8x36xf32>, vector<36x128xf32>, vector<8x128xf32> -> vector<8x128xf32>
    %c0_5 = arith.constant 0 : index
    %c0_6 = arith.constant 0 : index
    %15 = vector.load %arg4[%c0_5, %c0_6] : memref<8x1xf32, #tpu.memory_space<vmem>>, vector<8x1xf32>
    %16 = vector.broadcast %15 : vector<8x1xf32> to vector<8x128xf32>
    %17 = arith.addf %14, %16 : vector<8x128xf32>
    %18 = math.absf %17 : vector<8x128xf32>
    %cst_7 = arith.constant 0.000000e+00 : f32
    %19 = vector.broadcast %cst_7 : f32 to vector<8x128xf32>
    %20 = arith.subf %19, %18 : vector<8x128xf32>
    %21 = math.exp %20 : vector<8x128xf32>
    %22 = arith.mulf %21, %21 : vector<8x128xf32>
    %cst_8 = arith.constant 2.000000e+00 : f32
    %23 = vector.broadcast %cst_8 : f32 to vector<8x128xf32>
    %24 = arith.mulf %23, %21 : vector<8x128xf32>
    %cst_9 = arith.constant 1.000000e+00 : f32
    %25 = vector.broadcast %cst_9 : f32 to vector<8x128xf32>
    %26 = arith.addf %25, %24 : vector<8x128xf32>
    %cst_10 = arith.constant 2.000000e+00 : f32
    %27 = vector.broadcast %cst_10 : f32 to vector<8x128xf32>
    %28 = arith.mulf %27, %21 : vector<8x128xf32>
    %cst_11 = arith.constant 1.000000e+00 : f32
    %29 = vector.broadcast %cst_11 : f32 to vector<8x128xf32>
    %30 = arith.addf %29, %28 : vector<8x128xf32>
    %cst_12 = arith.constant 2.000000e+00 : f32
    %31 = vector.broadcast %cst_12 : f32 to vector<8x128xf32>
    %32 = arith.mulf %31, %22 : vector<8x128xf32>
    %33 = arith.addf %30, %32 : vector<8x128xf32>
    %34 = tpu.reciprocal %33 {approx = true} : vector<8x128xf32> -> vector<8x128xf32>
    %35 = arith.mulf %26, %34 : vector<8x128xf32>
    %cst_13 = arith.constant 2.000000e+00 : f32
    %36 = vector.broadcast %cst_13 : f32 to vector<8x128xf32>
    %37 = arith.mulf %36, %21 : vector<8x128xf32>
    %38 = arith.addf %37, %22 : vector<8x128xf32>
    %cst_14 = arith.constant 2.000000e+00 : f32
    %39 = vector.broadcast %cst_14 : f32 to vector<8x128xf32>
    %40 = arith.mulf %39, %21 : vector<8x128xf32>
    %cst_15 = arith.constant 2.000000e+00 : f32
    %41 = vector.broadcast %cst_15 : f32 to vector<8x128xf32>
    %42 = arith.addf %41, %40 : vector<8x128xf32>
    %43 = arith.addf %42, %22 : vector<8x128xf32>
    %44 = tpu.reciprocal %43 {approx = true} : vector<8x128xf32> -> vector<8x128xf32>
    %45 = arith.mulf %38, %44 : vector<8x128xf32>
    %cst_16 = arith.constant 0.000000e+00 : f32
    %46 = vector.broadcast %cst_16 : f32 to vector<8x128xf32>
    %47 = arith.cmpf oge, %17, %46 : vector<8x128xf32>
    %48 = arith.select %47, %35, %45 : vector<8x128xi1>, vector<8x128xf32>
    %49 = arith.mulf %17, %48 : vector<8x128xf32>
    %50 = vector.shape_cast %49 : vector<8x128xf32> to vector<1x8x128xf32>
    %c0_17 = arith.constant 0 : index
    %c0_18 = arith.constant 0 : index
    %c0_19 = arith.constant 0 : index
    %51 = vector.load %arg5[%c0_17, %c0_18, %c0_19] : memref<1x8x128xf32, #tpu.memory_space<vmem>>, vector<1x8x128xf32>
    tpu.vector_store %arg5[%c0_17, %c0_18, %c0_19], %50 {strides = array<i32>} : memref<1x8x128xf32, #tpu.memory_space<vmem>>, vector<1x8x128xf32>,
    return
  }
  func.func @transform_0(%arg0: i32, %arg1: i32) -> (i32, i32, i32, i32) {
    %c2_i32 = arith.constant 2 : i32
    %0 = arith.muli %arg0, %c2_i32 : i32
    %1 = arith.addi %0, %arg1 : i32
    %c0_i32 = arith.constant 0 : i32
    %c0_i32_0 = arith.constant 0 : i32
    %c0_i32_1 = arith.constant 0 : i32
    %c0_i32_2 = arith.constant 0 : i32
    return %1, %c0_i32, %c0_i32_0, %c0_i32_1 : i32, i32, i32, i32
  }
  func.func @transform_1(%arg0: i32, %arg1: i32) -> (i32, i32) {
    %c0_i32 = arith.constant 0 : i32
    %c0_i32_0 = arith.constant 0 : i32
    %c0_i32_1 = arith.constant 0 : i32
    return %c0_i32, %c0_i32_0 : i32, i32
  }
  func.func @transform_2(%arg0: i32, %arg1: i32) -> (i32, i32) {
    %c0_i32 = arith.constant 0 : i32
    %c0_i32_0 = arith.constant 0 : i32
    %c0_i32_1 = arith.constant 0 : i32
    return %c0_i32, %c0_i32_0 : i32, i32
  }
  func.func @transform_3(%arg0: i32, %arg1: i32) -> (i32, i32, i32) {
    %c0_i32 = arith.constant 0 : i32
    %c0_i32_0 = arith.constant 0 : i32
    return %arg0, %c0_i32, %arg1 : i32, i32, i32
  }
}

</mosaic_0001>

<llo_original>
// kernel: tpu_custom_call.1
$region0: #{tpu_custom_call.1}
  #allocation0 [shape = 'u32[]', space=smem, size = 0x4, offset = 0x4, fixed_abs, tag = 'smem constant byte address 0x4 - core index']
  #allocation1 [shape = 'u32[144,128]{1,0:T(1,128)}', space=vmem, size = 0x12000, scoped, tag = 'internal scratch']
  %s0 = inlined_call_operand.vmem [shape: f32[4,4,10,18], index: 0, kind: input, shape index: {}]
  %s1 = inlined_call_operand.vmem [shape: f32[8,36], index: 1, kind: input, shape index: {}]
  %s2 = inlined_call_operand.vmem [shape: f32[8,1], index: 2, kind: input, shape index: {}]
  %s3 = inlined_call_operand.hbm [shape: f32[2,8,256], index: 3, kind: output, shape index: {}]
  %s4 = sld [smem:[#allocation0]]
  $region45: #{tpu_custom_call.1} parent=0
    _
  %s6 = ssub.s32 1, %s4
  %s7 = scalar_select 0, %s6, %s4
  $region1: #{tpu_custom_call.1} parent=0
    #allocation2 [shape = 'u8[8192]{0}', space=vmem, size = 0x2000, scoped, tag = 'output window, operand 0']
    #allocation3 [shape = 's32[2]{0}', space=sflag, size = 0x8, scoped, tag = 'scoped memory for tpu_custom_call.1']
    %8 = vsyncpa [#allocation3], 0
    %s9 = scalar_lea.sflag [#allocation3], 1
    %10 = vsyncpa %s9, 0
    loop: start=0, step=1, limit=6
    $region2: #{tpu_custom_call.1} parent=1 // loop_pre_header
      _
    $region3: #{tpu_custom_call.1} parent=1 // loop_header
      %s12 = sphi 0, %s16
      %p13 = scmp.ge.s32.totalorder %s12, 6
      %s19 = sphi 0, %s31
      %s20 = sphi 0, %s27
      %s21 = sphi 0, %s19
      %s22 = sphi 0, %s20
      %s23 = sphi 0, %s21
      %s24 = sphi 0, %s22
      %s38 = sphi 0, %s40
      %s41 = sphi 0, %s38
      %s42 = sphi 0, %s41
      %s58 = sphi 0, %s42
      %s62 = sphi 0, %s62
      %s64 = sphi 0, %s62
      %s65 = sphi 0, %s64
      %s79 = sphi 0, %s65
      %s83 = sphi 0, %s83
      %s85 = sphi 0, %s83
      %s86 = sphi 0, %s85
      %s100 = sphi 0, %s86
      %s108 = sphi 0, %s110
      %s111 = sphi 0, %s108
      %s112 = sphi 0, %s111
      %s128 = sphi 0, %s112
    $region4: #{tpu_custom_call.1} parent=1 // loop_header_branch
      %15 = sbr.rel (%p13) target = $region8
    $region5: #{tpu_custom_call.1} parent=1 // loop_body
      %s17 = ssub.s32 %s12, 1
      %s18 = ssub.s32 %s12, 2
      %s25 = sadd.s32 1, %s20
      %p26 = scmp.ge.s32.totalorder %s25, 2
      %s27 = scalar_select %p26, 0, %s25
      %s28 = sadd.s32 1, %s19
      %s29 = scalar_select %p26, %s28, %s19
      %p30 = scmp.ge.s32.totalorder %s29, 2
      %s31 = scalar_select %p30, 0, %s29
      %s32 = smul.u32 %s19, 2
      %s33 = sadd.s32 %s32, %s20
      %s34 = smul.u32 %s31, 2
      %s35 = sadd.s32 %s34, %s27
      %s36 = ssub.s32 %s33, %s35
      %p37 = scmp.eq.s32.totalorder %s36, 0
      %s39 = sadd.s32 %s38, 1
      %s40 = scalar_select %p37, %s38, %s39
      %p43 = pneg %p37
      %p44 = scmp.eq.s32.totalorder %s12, 3
      %p45 = por %p43, %p44
      %p46 = scmp.ne.s32.totalorder %s38, %s41
      %p47 = scmp.eq.s32.totalorder %s12, 0
      %p48 = por %p46, %p47
      %p49 = scmp.ne.s32.totalorder %s38, %s41
      %p50 = scmp.eq.s32.totalorder %s17, 3
      %p51 = por %p49, %p50
      %p52 = scmp.ne.s32.totalorder %s41, %s42
      %p53 = scmp.eq.s32.totalorder %s17, 0
      %p54 = por %p52, %p53
      %p55 = scmp.ne.s32.totalorder %s41, %s42
      %p56 = scmp.eq.s32.totalorder %s18, 3
      %p57 = por %p55, %p56
      %p59 = scmp.ne.s32.totalorder %s42, %s58
      %p60 = scmp.eq.s32.totalorder %s18, 0
      %p61 = por %p59, %p60
      %s63 = sadd.s32 %s62, 1
      %p66 = scmp.eq.s32.totalorder %s12, 3
      %p67 = scmp.ne.s32.totalorder %s62, %s64
      %p68 = scmp.eq.s32.totalorder %s12, 0
      %p69 = por %p67, %p68
      %p70 = scmp.ne.s32.totalorder %s62, %s64
      %p71 = scmp.eq.s32.totalorder %s17, 3
      %p72 = por %p70, %p71
      %p73 = scmp.ne.s32.totalorder %s64, %s65
      %p74 = scmp.eq.s32.totalorder %s17, 0
      %p75 = por %p73, %p74
      %p76 = scmp.ne.s32.totalorder %s64, %s65
      %p77 = scmp.eq.s32.totalorder %s18, 3
      %p78 = por %p76, %p77
      %p80 = scmp.ne.s32.totalorder %s65, %s79
      %p81 = scmp.eq.s32.totalorder %s18, 0
      %p82 = por %p80, %p81
      %s84 = sadd.s32 %s83, 1
      %p87 = scmp.eq.s32.totalorder %s12, 3
      %p88 = scmp.ne.s32.totalorder %s83, %s85
      %p89 = scmp.eq.s32.totalorder %s12, 0
      %p90 = por %p88, %p89
      %p91 = scmp.ne.s32.totalorder %s83, %s85
      %p92 = scmp.eq.s32.totalorder %s17, 3
      %p93 = por %p91, %p92
      %p94 = scmp.ne.s32.totalorder %s85, %s86
      %p95 = scmp.eq.s32.totalorder %s17, 0
      %p96 = por %p94, %p95
      %p97 = scmp.ne.s32.totalorder %s85, %s86
      %p98 = scmp.eq.s32.totalorder %s18, 3
      %p99 = por %p97, %p98
      %p101 = scmp.ne.s32.totalorder %s86, %s100
      %p102 = scmp.eq.s32.totalorder %s18, 0
      %p103 = por %p101, %p102
      %s104 = ssub.s32 %s19, %s31
      %s105 = ssub.s32 %s20, %s27
      %s106 = sor.u32 %s104, %s105
      %p107 = scmp.eq.s32.totalorder %s106, 0
      %s109 = sadd.s32 %s108, 1
      %s110 = scalar_select %p107, %s108, %s109
      %p113 = pneg %p107
      %p114 = scmp.eq.s32.totalorder %s12, 3
      %p115 = por %p113, %p114
      %p116 = scmp.ne.s32.totalorder %s108, %s111
      %p117 = scmp.eq.s32.totalorder %s12, 0
      %p118 = por %p116, %p117
      %p119 = scmp.ne.s32.totalorder %s108, %s111
      %p120 = scmp.eq.s32.totalorder %s17, 3
      %p121 = por %p119, %p120
      %p122 = scmp.ne.s32.totalorder %s111, %s112
      %p123 = scmp.eq.s32.totalorder %s17, 0
      %p124 = por %p122, %p123
      %p125 = scmp.ne.s32.totalorder %s111, %s112
      %p126 = scmp.eq.s32.totalorder %s18, 3
      %p127 = por %p125, %p126
      %p129 = scmp.ne.s32.totalorder %s112, %s128
      %p130 = scmp.eq.s32.totalorder %s18, 0
      %p131 = por %p129, %p130
      %p132 = scmp.le.s32.totalorder 1, %s12
      %p133 = scmp.lt.s32.totalorder %s12, 5
      %p134 = pnand %p132, %p133
      %p135 = pneg %p134
      // Predicated region
      $region9: #{tpu_custom_call.1} parent=5 // pred_check
        _
      $region10: #{tpu_custom_call.1} parent=5 // pred_check_branch
        %137 = sbr.rel (%p134) target = $region12
      $region11: #{tpu_custom_call.1} parent=5 // pred_region
        %s138 = ssub.s32 %s12, 1
        // Predicated region
        $region13: #{tpu_custom_call.1} parent=11 // pred_check
          %p139 = pneg %p75
        $region14: #{tpu_custom_call.1} parent=11 // pred_check_branch
          %141 = sbr.rel (%p139) target = $region16
        $region15: #{tpu_custom_call.1} parent=11 // pred_region
          _
        $region16: #{tpu_custom_call.1} parent=11 // pred_fallthru
          _
        // Predicated region
        $region17: #{tpu_custom_call.1} parent=11 // pred_check
          %p142 = pneg %p96
        $region18: #{tpu_custom_call.1} parent=11 // pred_check_branch
          %144 = sbr.rel (%p142) target = $region20
        $region19: #{tpu_custom_call.1} parent=11 // pred_region
          _
        $region20: #{tpu_custom_call.1} parent=11 // pred_fallthru
          _
      $region12: #{tpu_custom_call.1} parent=5 // pred_fallthru
        _
      %p145 = scmp.lt.s32.totalorder %s12, 4
      // Predicated region
      $region21: #{tpu_custom_call.1} parent=5 // pred_check
        %p146 = pneg %p145
      $region22: #{tpu_custom_call.1} parent=5 // pred_check_branch
        %148 = sbr.rel (%p146) target = $region24
      $region23: #{tpu_custom_call.1} parent=5 // pred_region
        // Predicated region
        $region25: #{tpu_custom_call.1} parent=23 // pred_check
          %p149 = pneg %p48
        $region26: #{tpu_custom_call.1} parent=23 // pred_check_branch
          %151 = sbr.rel (%p149) target = $region28
        $region27: #{tpu_custom_call.1} parent=23 // pred_region
          %s152 = smul.u32 %s19, 2
          %s153 = sadd.s32 %s152, %s20
          %p154 = scmp.lt.s32.totalorder %s153, 3
          %s155 = scalar_select %p154, %s153, 3
          %s156 = smul.addr %s155, 8
          %s157 = smul.addr %s156, 8
          %s158 = scalar_lea.vmem %s0, %s157
          %s159 = smul.u32 %s19, 2
          %s160 = sadd.s32 %s159, %s20
        $region28: #{tpu_custom_call.1} parent=23 // pred_fallthru
          _
      $region24: #{tpu_custom_call.1} parent=5 // pred_fallthru
        _
      %p161 = scmp.le.s32.totalorder 1, %s12
      %p162 = scmp.lt.s32.totalorder %s12, 5
      %p163 = pnand %p161, %p162
      %p164 = pneg %p163
      // Predicated region
      $region29: #{tpu_custom_call.1} parent=5 // pred_check
        _
      $region30: #{tpu_custom_call.1} parent=5 // pred_check_branch
        %166 = sbr.rel (%p163) target = $region32
      $region31: #{tpu_custom_call.1} parent=5 // pred_region
        %s167 = ssub.s32 %s12, 1
        %s168 = smul.u32 %s21, 2
        %s169 = sadd.s32 %s168, %s22
        %p170 = scmp.lt.s32.totalorder %s169, 3
        %s171 = scalar_select %p170, %s169, 3
        %s172 = smul.addr %s171, 8
        %s173 = smul.addr %s172, 8
        %s174 = scalar_lea.vmem %s0, %s173
        %p175 = pneg %p54
        %p176 = pneg %p51
        %p177 = pneg %p75
        %p178 = pneg %p72
        %p179 = pneg %p96
        %p180 = pneg %p93
        %p181 = pneg %p124
        %p182 = pneg %p121
        %s183 = sand.u32 %s111, 1
        %s184 = scalar_lea.sflag [#allocation3], %s183
        %s185 = sand.u32 %s111, 1
        %s186 = smul.addr %s185, 8
        %s187 = scalar_lea.vmem [#allocation2], %s186
        %s188 = smul.u32 %s21, 2
        %s189 = sadd.s32 %s188, %s22
        %p190 = scmp.lt.s32.totalorder %s189, 3
        %s191 = scalar_select %p190, %s189, 3
        %s192 = smul.addr %s191, 8
        %s193 = smul.addr %s192, 8
        %s194 = scalar_lea.vmem %s0, %s193
        %s195 = smul.u32 %s21, 2
        %s196 = sadd.s32 %s195, %s22
        %v197 = vld [vmem:[%s194] sm:$0xff]
        %v198 = vld [vmem:[%s194 + $0x8] sm:$0x3]
        %v199 = vld [vmem:[%s194 + $0x10] sm:$0xff]
        %v200 = vld [vmem:[%s194 + $0x18] sm:$0x3]
        %v201 = vld [vmem:[%s194 + $0x20] sm:$0xff]
        %v202 = vld [vmem:[%s194 + $0x28] sm:$0x3]
        %v203 = vld [vmem:[%s194 + $0x30] sm:$0xff]
        %v204 = vld [vmem:[%s194 + $0x38] sm:$0x3]
        %209 = vrot.lane.b32.xlu0 %v197, 127
        %v210 = vpop.permute.xlu0 %209
        %211 = vrot.lane.b32.xlu0 %v199, 127
        %v212 = vpop.permute.xlu0 %211
        %213 = vrot.lane.b32.xlu0 %v201, 127
        %v214 = vpop.permute.xlu0 %213
        %215 = vrot.lane.b32.xlu0 %v203, 127
        %v216 = vpop.permute.xlu0 %215
        %221 = vrot.lane.b32.xlu0 %v197, 126
        %v222 = vpop.permute.xlu0 %221
        %223 = vrot.lane.b32.xlu0 %v199, 126
        %v224 = vpop.permute.xlu0 %223
        %225 = vrot.lane.b32.xlu0 %v201, 126
        %v226 = vpop.permute.xlu0 %225
        %227 = vrot.lane.b32.xlu0 %v203, 126
        %v228 = vpop.permute.xlu0 %227
        %vm237 = vcmask 1046528
        %v238 = vrot.slane %v197, 1
        %v239 = vrot.slane %v198, 1
        %v240 = vsel %vm237, %v238, %v239
        %v241 = vrot.slane %v199, 1
        %v242 = vrot.slane %v200, 1
        %v243 = vsel %vm237, %v241, %v242
        %v244 = vrot.slane %v201, 1
        %v245 = vrot.slane %v202, 1
        %v246 = vsel %vm237, %v244, %v245
        %v247 = vrot.slane %v203, 1
        %v248 = vrot.slane %v204, 1
        %v249 = vsel %vm237, %v247, %v248
        %254 = vrot.lane.b32.xlu0 %v240, 127
        %v255 = vpop.permute.xlu0 %254
        %256 = vrot.lane.b32.xlu0 %v243, 127
        %v257 = vpop.permute.xlu0 %256
        %258 = vrot.lane.b32.xlu0 %v246, 127
        %v259 = vpop.permute.xlu0 %258
        %260 = vrot.lane.b32.xlu0 %v249, 127
        %v261 = vpop.permute.xlu0 %260
        %266 = vrot.lane.b32.xlu0 %v240, 126
        %v267 = vpop.permute.xlu0 %266
        %268 = vrot.lane.b32.xlu0 %v243, 126
        %v269 = vpop.permute.xlu0 %268
        %270 = vrot.lane.b32.xlu0 %v246, 126
        %v271 = vpop.permute.xlu0 %270
        %272 = vrot.lane.b32.xlu0 %v249, 126
        %v273 = vpop.permute.xlu0 %272
        %vm278 = vcmask 1045504
        %v279 = vrot.slane %v197, 2
        %v280 = vrot.slane %v198, 2
        %v281 = vsel %vm278, %v279, %v280
        %v282 = vrot.slane %v199, 2
        %v283 = vrot.slane %v200, 2
        %v284 = vsel %vm278, %v282, %v283
        %v285 = vrot.slane %v201, 2
        %v286 = vrot.slane %v202, 2
        %v287 = vsel %vm278, %v285, %v286
        %v288 = vrot.slane %v203, 2
        %v289 = vrot.slane %v204, 2
        %v290 = vsel %vm278, %v288, %v289
        %295 = vrot.lane.b32.xlu0 %v281, 127
        %v296 = vpop.permute.xlu0 %295
        %297 = vrot.lane.b32.xlu0 %v284, 127
        %v298 = vpop.permute.xlu0 %297
        %299 = vrot.lane.b32.xlu0 %v287, 127
        %v300 = vpop.permute.xlu0 %299
        %301 = vrot.lane.b32.xlu0 %v290, 127
        %v302 = vpop.permute.xlu0 %301
        %307 = vrot.lane.b32.xlu0 %v281, 126
        %v308 = vpop.permute.xlu0 %307
        %309 = vrot.lane.b32.xlu0 %v284, 126
        %v310 = vpop.permute.xlu0 %309
        %311 = vrot.lane.b32.xlu0 %v287, 126
        %v312 = vpop.permute.xlu0 %311
        %313 = vrot.lane.b32.xlu0 %v290, 126
        %v314 = vpop.permute.xlu0 %313
        %v319 = vcombine.low %v197, %v201
        %v320 = vcombine.high %v197, %v201
        %v322 = vunpack.c.l.s4 1983009808
        %v323 = vunpack.c.0.s8 %v322
        %v324 = vlaneseq
        %v325 = vshrl.u32 %v324, 7
        %v326 = vsub.s32 %v323, %v325
        %v327 = vrot.slane %v319, %v326
        %v329 = vunpack.c.l.s4 1983009808
        %v330 = vunpack.c.0.s8 %v329
        %v331 = vlaneseq
        %v332 = vshrl.u32 %v331, 7
        %v333 = vsub.s32 %v330, %v332
        %v334 = vrot.slane %v320, %v333
        %v335 = vcombine.low %v199, %v203
        %v336 = vcombine.high %v199, %v203
        %v338 = vunpack.c.l.s4 1983009808
        %v339 = vunpack.c.0.s8 %v338
        %v340 = vlaneseq
        %v341 = vshrl.u32 %v340, 7
        %v342 = vsub.s32 %v339, %v341
        %v343 = vrot.slane %v335, %v342
        %v345 = vunpack.c.l.s4 1983009808
        %v346 = vunpack.c.0.s8 %v345
        %v347 = vlaneseq
        %v348 = vshrl.u32 %v347, 7
        %v349 = vsub.s32 %v346, %v348
        %v350 = vrot.slane %v336, %v349
        %v351 = vcombine.low %v210, %v214
        %v352 = vcombine.high %v210, %v214
        %v354 = vunpack.c.l.s4 1983009808
        %v355 = vunpack.c.0.s8 %v354
        %v356 = vlaneseq
        %v357 = vshrl.u32 %v356, 7
        %v358 = vsub.s32 %v355, %v357
        %v359 = vrot.slane %v351, %v358
        %v361 = vunpack.c.l.s4 1983009808
        %v362 = vunpack.c.0.s8 %v361
        %v363 = vlaneseq
        %v364 = vshrl.u32 %v363, 7
        %v365 = vsub.s32 %v362, %v364
        %v366 = vrot.slane %v352, %v365
        %v367 = vcombine.low %v212, %v216
        %v368 = vcombine.high %v212, %v216
        %v370 = vunpack.c.l.s4 1983009808
        %v371 = vunpack.c.0.s8 %v370
        %v372 = vlaneseq
        %v373 = vshrl.u32 %v372, 7
        %v374 = vsub.s32 %v371, %v373
        %v375 = vrot.slane %v367, %v374
        %v377 = vunpack.c.l.s4 1983009808
        %v378 = vunpack.c.0.s8 %v377
        %v379 = vlaneseq
        %v380 = vshrl.u32 %v379, 7
        %v381 = vsub.s32 %v378, %v380
        %v382 = vrot.slane %v368, %v381
        %v383 = vcombine.low %v327, %v343
        %v384 = vcombine.high %v327, %v343
        %v386 = vunpack.c.l.s4 1934713408
        %v387 = vunpack.c.0.s8 %v386
        %v388 = vlaneseq
        %v389 = vshrl.u32 %v388, 7
        %v390 = vsub.s32 %v387, %v389
        %v391 = vrot.slane %v383, %v390
        %v393 = vunpack.c.l.s4 1934713408
        %v394 = vunpack.c.0.s8 %v393
        %v395 = vlaneseq
        %v396 = vshrl.u32 %v395, 7
        %v397 = vsub.s32 %v394, %v396
        %v398 = vrot.slane %v384, %v397
        %v399 = vcombine.low %v334, %v350
        %v400 = vcombine.high %v334, %v350
        %v402 = vunpack.c.l.s4 1934713408
        %v403 = vunpack.c.0.s8 %v402
        %v404 = vlaneseq
        %v405 = vshrl.u32 %v404, 7
        %v406 = vsub.s32 %v403, %v405
        %v407 = vrot.slane %v399, %v406
        %v409 = vunpack.c.l.s4 1934713408
        %v410 = vunpack.c.0.s8 %v409
        %v411 = vlaneseq
        %v412 = vshrl.u32 %v411, 7
        %v413 = vsub.s32 %v410, %v412
        %v414 = vrot.slane %v400, %v413
        %v415 = vcombine.low %v359, %v375
        %v416 = vcombine.high %v359, %v375
        %v418 = vunpack.c.l.s4 1934713408
        %v419 = vunpack.c.0.s8 %v418
        %v420 = vlaneseq
        %v421 = vshrl.u32 %v420, 7
        %v422 = vsub.s32 %v419, %v421
        %v423 = vrot.slane %v415, %v422
        %v425 = vunpack.c.l.s4 1934713408
        %v426 = vunpack.c.0.s8 %v425
        %v427 = vlaneseq
        %v428 = vshrl.u32 %v427, 7
        %v429 = vsub.s32 %v426, %v428
        %v430 = vrot.slane %v416, %v429
        %v431 = vcombine.low %v366, %v382
        %v432 = vcombine.high %v366, %v382
        %v434 = vunpack.c.l.s4 1934713408
        %v435 = vunpack.c.0.s8 %v434
        %v436 = vlaneseq
        %v437 = vshrl.u32 %v436, 7
        %v438 = vsub.s32 %v435, %v437
        %v439 = vrot.slane %v431, %v438
        %v441 = vunpack.c.l.s4 1934713408
        %v442 = vunpack.c.0.s8 %v441
        %v443 = vlaneseq
        %v444 = vshrl.u32 %v443, 7
        %v445 = vsub.s32 %v442, %v444
        %v446 = vrot.slane %v432, %v445
        %v447 = vcombine.low %v391, %v423
        %v448 = vcombine.high %v391, %v423
        %v449 = vcombine.low %v398, %v430
        %v450 = vcombine.high %v398, %v430
        %v451 = vcombine.low %v407, %v439
        %v452 = vcombine.high %v407, %v439
        %v453 = vcombine.low %v414, %v446
        %v454 = vcombine.high %v414, %v446
        %v455 = vcombine.low %v222, %v226
        %v456 = vcombine.high %v222, %v226
        %v458 = vunpack.c.l.s4 1983009808
        %v459 = vunpack.c.0.s8 %v458
        %v460 = vlaneseq
        %v461 = vshrl.u32 %v460, 7
        %v462 = vsub.s32 %v459, %v461
        %v463 = vrot.slane %v455, %v462
        %v465 = vunpack.c.l.s4 1983009808
        %v466 = vunpack.c.0.s8 %v465
        %v467 = vlaneseq
        %v468 = vshrl.u32 %v467, 7
        %v469 = vsub.s32 %v466, %v468
        %v470 = vrot.slane %v456, %v469
        %v471 = vcombine.low %v224, %v228
        %v472 = vcombine.high %v224, %v228
        %v474 = vunpack.c.l.s4 1983009808
        %v475 = vunpack.c.0.s8 %v474
        %v476 = vlaneseq
        %v477 = vshrl.u32 %v476, 7
        %v478 = vsub.s32 %v475, %v477
        %v479 = vrot.slane %v471, %v478
        %v481 = vunpack.c.l.s4 1983009808
        %v482 = vunpack.c.0.s8 %v481
        %v483 = vlaneseq
        %v484 = vshrl.u32 %v483, 7
        %v485 = vsub.s32 %v482, %v484
        %v486 = vrot.slane %v472, %v485
        %v487 = vcombine.low %v240, %v246
        %v488 = vcombine.high %v240, %v246
        %v490 = vunpack.c.l.s4 1983009808
        %v491 = vunpack.c.0.s8 %v490
        %v492 = vlaneseq
        %v493 = vshrl.u32 %v492, 7
        %v494 = vsub.s32 %v491, %v493
        %v495 = vrot.slane %v487, %v494
        %v497 = vunpack.c.l.s4 1983009808
        %v498 = vunpack.c.0.s8 %v497
        %v499 = vlaneseq
        %v500 = vshrl.u32 %v499, 7
        %v501 = vsub.s32 %v498, %v500
        %v502 = vrot.slane %v488, %v501
        %v503 = vcombine.low %v243, %v249
        %v504 = vcombine.high %v243, %v249
        %v506 = vunpack.c.l.s4 1983009808
        %v507 = vunpack.c.0.s8 %v506
        %v508 = vlaneseq
        %v509 = vshrl.u32 %v508, 7
        %v510 = vsub.s32 %v507, %v509
        %v511 = vrot.slane %v503, %v510
        %v513 = vunpack.c.l.s4 1983009808
        %v514 = vunpack.c.0.s8 %v513
        %v515 = vlaneseq
        %v516 = vshrl.u32 %v515, 7
        %v517 = vsub.s32 %v514, %v516
        %v518 = vrot.slane %v504, %v517
        %v519 = vcombine.low %v463, %v479
        %v520 = vcombine.high %v463, %v479
        %v522 = vunpack.c.l.s4 1934713408
        %v523 = vunpack.c.0.s8 %v522
        %v524 = vlaneseq
        %v525 = vshrl.u32 %v524, 7
        %v526 = vsub.s32 %v523, %v525
        %v527 = vrot.slane %v519, %v526
        %v529 = vunpack.c.l.s4 1934713408
        %v530 = vunpack.c.0.s8 %v529
        %v531 = vlaneseq
        %v532 = vshrl.u32 %v531, 7
        %v533 = vsub.s32 %v530, %v532
        %v534 = vrot.slane %v520, %v533
        %v535 = vcombine.low %v470, %v486
        %v536 = vcombine.high %v470, %v486
        %v538 = vunpack.c.l.s4 1934713408
        %v539 = vunpack.c.0.s8 %v538
        %v540 = vlaneseq
        %v541 = vshrl.u32 %v540, 7
        %v542 = vsub.s32 %v539, %v541
        %v543 = vrot.slane %v535, %v542
        %v545 = vunpack.c.l.s4 1934713408
        %v546 = vunpack.c.0.s8 %v545
        %v547 = vlaneseq
        %v548 = vshrl.u32 %v547, 7
        %v549 = vsub.s32 %v546, %v548
        %v550 = vrot.slane %v536, %v549
        %v551 = vcombine.low %v495, %v511
        %v552 = vcombine.high %v495, %v511
        %v554 = vunpack.c.l.s4 1934713408
        %v555 = vunpack.c.0.s8 %v554
        %v556 = vlaneseq
        %v557 = vshrl.u32 %v556, 7
        %v558 = vsub.s32 %v555, %v557
        %v559 = vrot.slane %v551, %v558
        %v561 = vunpack.c.l.s4 1934713408
        %v562 = vunpack.c.0.s8 %v561
        %v563 = vlaneseq
        %v564 = vshrl.u32 %v563, 7
        %v565 = vsub.s32 %v562, %v564
        %v566 = vrot.slane %v552, %v565
        %v567 = vcombine.low %v502, %v518
        %v568 = vcombine.high %v502, %v518
        %v570 = vunpack.c.l.s4 1934713408
        %v571 = vunpack.c.0.s8 %v570
        %v572 = vlaneseq
        %v573 = vshrl.u32 %v572, 7
        %v574 = vsub.s32 %v571, %v573
        %v575 = vrot.slane %v567, %v574
        %v577 = vunpack.c.l.s4 1934713408
        %v578 = vunpack.c.0.s8 %v577
        %v579 = vlaneseq
        %v580 = vshrl.u32 %v579, 7
        %v581 = vsub.s32 %v578, %v580
        %v582 = vrot.slane %v568, %v581
        %v583 = vcombine.low %v527, %v559
        %v584 = vcombine.high %v527, %v559
        %v585 = vcombine.low %v534, %v566
        %v586 = vcombine.high %v534, %v566
        %v587 = vcombine.low %v543, %v575
        %v588 = vcombine.high %v543, %v575
        %v589 = vcombine.low %v550, %v582
        %v590 = vcombine.high %v550, %v582
        %v591 = vcombine.low %v255, %v259
        %v592 = vcombine.high %v255, %v259
        %v594 = vunpack.c.l.s4 1983009808
        %v595 = vunpack.c.0.s8 %v594
        %v596 = vlaneseq
        %v597 = vshrl.u32 %v596, 7
        %v598 = vsub.s32 %v595, %v597
        %v599 = vrot.slane %v591, %v598
        %v601 = vunpack.c.l.s4 1983009808
        %v602 = vunpack.c.0.s8 %v601
        %v603 = vlaneseq
        %v604 = vshrl.u32 %v603, 7
        %v605 = vsub.s32 %v602, %v604
        %v606 = vrot.slane %v592, %v605
        %v607 = vcombine.low %v257, %v261
        %v608 = vcombine.high %v257, %v261
        %v610 = vunpack.c.l.s4 1983009808
        %v611 = vunpack.c.0.s8 %v610
        %v612 = vlaneseq
        %v613 = vshrl.u32 %v612, 7
        %v614 = vsub.s32 %v611, %v613
        %v615 = vrot.slane %v607, %v614
        %v617 = vunpack.c.l.s4 1983009808
        %v618 = vunpack.c.0.s8 %v617
        %v619 = vlaneseq
        %v620 = vshrl.u32 %v619, 7
        %v621 = vsub.s32 %v618, %v620
        %v622 = vrot.slane %v608, %v621
        %v623 = vcombine.low %v267, %v271
        %v624 = vcombine.high %v267, %v271
        %v626 = vunpack.c.l.s4 1983009808
        %v627 = vunpack.c.0.s8 %v626
        %v628 = vlaneseq
        %v629 = vshrl.u32 %v628, 7
        %v630 = vsub.s32 %v627, %v629
        %v631 = vrot.slane %v623, %v630
        %v633 = vunpack.c.l.s4 1983009808
        %v634 = vunpack.c.0.s8 %v633
        %v635 = vlaneseq
        %v636 = vshrl.u32 %v635, 7
        %v637 = vsub.s32 %v634, %v636
        %v638 = vrot.slane %v624, %v637
        %v639 = vcombine.low %v269, %v273
        %v640 = vcombine.high %v269, %v273
        %v642 = vunpack.c.l.s4 1983009808
        %v643 = vunpack.c.0.s8 %v642
        %v644 = vlaneseq
        %v645 = vshrl.u32 %v644, 7
        %v646 = vsub.s32 %v643, %v645
        %v647 = vrot.slane %v639, %v646
        %v649 = vunpack.c.l.s4 1983009808
        %v650 = vunpack.c.0.s8 %v649
        %v651 = vlaneseq
        %v652 = vshrl.u32 %v651, 7
        %v653 = vsub.s32 %v650, %v652
        %v654 = vrot.slane %v640, %v653
        %v655 = vcombine.low %v599, %v615
        %v656 = vcombine.high %v599, %v615
        %v658 = vunpack.c.l.s4 1934713408
        %v659 = vunpack.c.0.s8 %v658
        %v660 = vlaneseq
        %v661 = vshrl.u32 %v660, 7
        %v662 = vsub.s32 %v659, %v661
        %v663 = vrot.slane %v655, %v662
        %v665 = vunpack.c.l.s4 1934713408
        %v666 = vunpack.c.0.s8 %v665
        %v667 = vlaneseq
        %v668 = vshrl.u32 %v667, 7
        %v669 = vsub.s32 %v666, %v668
        %v670 = vrot.slane %v656, %v669
        %v671 = vcombine.low %v606, %v622
        %v672 = vcombine.high %v606, %v622
        %v674 = vunpack.c.l.s4 1934713408
        %v675 = vunpack.c.0.s8 %v674
        %v676 = vlaneseq
        %v677 = vshrl.u32 %v676, 7
        %v678 = vsub.s32 %v675, %v677
        %v679 = vrot.slane %v671, %v678
        %v681 = vunpack.c.l.s4 1934713408
        %v682 = vunpack.c.0.s8 %v681
        %v683 = vlaneseq
        %v684 = vshrl.u32 %v683, 7
        %v685 = vsub.s32 %v682, %v684
        %v686 = vrot.slane %v672, %v685
        %v687 = vcombine.low %v631, %v647
        %v688 = vcombine.high %v631, %v647
        %v690 = vunpack.c.l.s4 1934713408
        %v691 = vunpack.c.0.s8 %v690
        %v692 = vlaneseq
        %v693 = vshrl.u32 %v692, 7
        %v694 = vsub.s32 %v691, %v693
        %v695 = vrot.slane %v687, %v694
        %v697 = vunpack.c.l.s4 1934713408
        %v698 = vunpack.c.0.s8 %v697
        %v699 = vlaneseq
        %v700 = vshrl.u32 %v699, 7
        %v701 = vsub.s32 %v698, %v700
        %v702 = vrot.slane %v688, %v701
        %v703 = vcombine.low %v638, %v654
        %v704 = vcombine.high %v638, %v654
        %v706 = vunpack.c.l.s4 1934713408
        %v707 = vunpack.c.0.s8 %v706
        %v708 = vlaneseq
        %v709 = vshrl.u32 %v708, 7
        %v710 = vsub.s32 %v707, %v709
        %v711 = vrot.slane %v703, %v710
        %v713 = vunpack.c.l.s4 1934713408
        %v714 = vunpack.c.0.s8 %v713
        %v715 = vlaneseq
        %v716 = vshrl.u32 %v715, 7
        %v717 = vsub.s32 %v714, %v716
        %v718 = vrot.slane %v704, %v717
        %v719 = vcombine.low %v663, %v695
        %v720 = vcombine.high %v663, %v695
        %v721 = vcombine.low %v670, %v702
        %v722 = vcombine.high %v670, %v702
        %v723 = vcombine.low %v679, %v711
        %v724 = vcombine.high %v679, %v711
        %v725 = vcombine.low %v686, %v718
        %v726 = vcombine.high %v686, %v718
        %v727 = vcombine.low %v281, %v287
        %v728 = vcombine.high %v281, %v287
        %v730 = vunpack.c.l.s4 1983009808
        %v731 = vunpack.c.0.s8 %v730
        %v732 = vlaneseq
        %v733 = vshrl.u32 %v732, 7
        %v734 = vsub.s32 %v731, %v733
        %v735 = vrot.slane %v727, %v734
        %v737 = vunpack.c.l.s4 1983009808
        %v738 = vunpack.c.0.s8 %v737
        %v739 = vlaneseq
        %v740 = vshrl.u32 %v739, 7
        %v741 = vsub.s32 %v738, %v740
        %v742 = vrot.slane %v728, %v741
        %v743 = vcombine.low %v284, %v290
        %v744 = vcombine.high %v284, %v290
        %v746 = vunpack.c.l.s4 1983009808
        %v747 = vunpack.c.0.s8 %v746
        %v748 = vlaneseq
        %v749 = vshrl.u32 %v748, 7
        %v750 = vsub.s32 %v747, %v749
        %v751 = vrot.slane %v743, %v750
        %v753 = vunpack.c.l.s4 1983009808
        %v754 = vunpack.c.0.s8 %v753
        %v755 = vlaneseq
        %v756 = vshrl.u32 %v755, 7
        %v757 = vsub.s32 %v754, %v756
        %v758 = vrot.slane %v744, %v757
        %v759 = vcombine.low %v296, %v300
        %v760 = vcombine.high %v296, %v300
        %v762 = vunpack.c.l.s4 1983009808
        %v763 = vunpack.c.0.s8 %v762
        %v764 = vlaneseq
        %v765 = vshrl.u32 %v764, 7
        %v766 = vsub.s32 %v763, %v765
        %v767 = vrot.slane %v759, %v766
        %v769 = vunpack.c.l.s4 1983009808
        %v770 = vunpack.c.0.s8 %v769
        %v771 = vlaneseq
        %v772 = vshrl.u32 %v771, 7
        %v773 = vsub.s32 %v770, %v772
        %v774 = vrot.slane %v760, %v773
        %v775 = vcombine.low %v298, %v302
        %v776 = vcombine.high %v298, %v302
        %v778 = vunpack.c.l.s4 1983009808
        %v779 = vunpack.c.0.s8 %v778
        %v780 = vlaneseq
        %v781 = vshrl.u32 %v780, 7
        %v782 = vsub.s32 %v779, %v781
        %v783 = vrot.slane %v775, %v782
        %v785 = vunpack.c.l.s4 1983009808
        %v786 = vunpack.c.0.s8 %v785
        %v787 = vlaneseq
        %v788 = vshrl.u32 %v787, 7
        %v789 = vsub.s32 %v786, %v788
        %v790 = vrot.slane %v776, %v789
        %v791 = vcombine.low %v735, %v751
        %v792 = vcombine.high %v735, %v751
        %v794 = vunpack.c.l.s4 1934713408
        %v795 = vunpack.c.0.s8 %v794
        %v796 = vlaneseq
        %v797 = vshrl.u32 %v796, 7
        %v798 = vsub.s32 %v795, %v797
        %v799 = vrot.slane %v791, %v798
        %v801 = vunpack.c.l.s4 1934713408
        %v802 = vunpack.c.0.s8 %v801
        %v803 = vlaneseq
        %v804 = vshrl.u32 %v803, 7
        %v805 = vsub.s32 %v802, %v804
        %v806 = vrot.slane %v792, %v805
        %v807 = vcombine.low %v742, %v758
        %v808 = vcombine.high %v742, %v758
        %v810 = vunpack.c.l.s4 1934713408
        %v811 = vunpack.c.0.s8 %v810
        %v812 = vlaneseq
        %v813 = vshrl.u32 %v812, 7
        %v814 = vsub.s32 %v811, %v813
        %v815 = vrot.slane %v807, %v814
        %v817 = vunpack.c.l.s4 1934713408
        %v818 = vunpack.c.0.s8 %v817
        %v819 = vlaneseq
        %v820 = vshrl.u32 %v819, 7
        %v821 = vsub.s32 %v818, %v820
        %v822 = vrot.slane %v808, %v821
        %v823 = vcombine.low %v767, %v783
        %v824 = vcombine.high %v767, %v783
        %v826 = vunpack.c.l.s4 1934713408
        %v827 = vunpack.c.0.s8 %v826
        %v828 = vlaneseq
        %v829 = vshrl.u32 %v828, 7
        %v830 = vsub.s32 %v827, %v829
        %v831 = vrot.slane %v823, %v830
        %v833 = vunpack.c.l.s4 1934713408
        %v834 = vunpack.c.0.s8 %v833
        %v835 = vlaneseq
        %v836 = vshrl.u32 %v835, 7
        %v837 = vsub.s32 %v834, %v836
        %v838 = vrot.slane %v824, %v837
        %v839 = vcombine.low %v774, %v790
        %v840 = vcombine.high %v774, %v790
        %v842 = vunpack.c.l.s4 1934713408
        %v843 = vunpack.c.0.s8 %v842
        %v844 = vlaneseq
        %v845 = vshrl.u32 %v844, 7
        %v846 = vsub.s32 %v843, %v845
        %v847 = vrot.slane %v839, %v846
        %v849 = vunpack.c.l.s4 1934713408
        %v850 = vunpack.c.0.s8 %v849
        %v851 = vlaneseq
        %v852 = vshrl.u32 %v851, 7
        %v853 = vsub.s32 %v850, %v852
        %v854 = vrot.slane %v840, %v853
        %v855 = vcombine.low %v799, %v831
        %v856 = vcombine.high %v799, %v831
        %v857 = vcombine.low %v806, %v838
        %v858 = vcombine.high %v806, %v838
        %v859 = vcombine.low %v815, %v847
        %v860 = vcombine.high %v815, %v847
        %v861 = vcombine.low %v822, %v854
        %v862 = vcombine.high %v822, %v854
        %v863 = vcombine.low %v308, %v312
        %v864 = vcombine.high %v308, %v312
        %v866 = vunpack.c.l.s4 1983009808
        %v867 = vunpack.c.0.s8 %v866
        %v868 = vlaneseq
        %v869 = vshrl.u32 %v868, 7
        %v870 = vsub.s32 %v867, %v869
        %v871 = vrot.slane %v863, %v870
        %v873 = vunpack.c.l.s4 1983009808
        %v874 = vunpack.c.0.s8 %v873
        %v875 = vlaneseq
        %v876 = vshrl.u32 %v875, 7
        %v877 = vsub.s32 %v874, %v876
        %v878 = vrot.slane %v864, %v877
        %v879 = vcombine.low %v310, %v314
        %v880 = vcombine.high %v310, %v314
        %v882 = vunpack.c.l.s4 1983009808
        %v883 = vunpack.c.0.s8 %v882
        %v884 = vlaneseq
        %v885 = vshrl.u32 %v884, 7
        %v886 = vsub.s32 %v883, %v885
        %v887 = vrot.slane %v879, %v886
        %v889 = vunpack.c.l.s4 1983009808
        %v890 = vunpack.c.0.s8 %v889
        %v891 = vlaneseq
        %v892 = vshrl.u32 %v891, 7
        %v893 = vsub.s32 %v890, %v892
        %v894 = vrot.slane %v880, %v893
        %v895 = vcombine.low %v871, %v887
        %v896 = vcombine.high %v871, %v887
        %v898 = vunpack.c.l.s4 1934713408
        %v899 = vunpack.c.0.s8 %v898
        %v900 = vlaneseq
        %v901 = vshrl.u32 %v900, 7
        %v902 = vsub.s32 %v899, %v901
        %v903 = vrot.slane %v895, %v902
        %v905 = vunpack.c.l.s4 1934713408
        %v906 = vunpack.c.0.s8 %v905
        %v907 = vlaneseq
        %v908 = vshrl.u32 %v907, 7
        %v909 = vsub.s32 %v906, %v908
        %v910 = vrot.slane %v896, %v909
        %v911 = vcombine.low %v878, %v894
        %v912 = vcombine.high %v878, %v894
        %v914 = vunpack.c.l.s4 1934713408
        %v915 = vunpack.c.0.s8 %v914
        %v916 = vlaneseq
        %v917 = vshrl.u32 %v916, 7
        %v918 = vsub.s32 %v915, %v917
        %v919 = vrot.slane %v911, %v918
        %v921 = vunpack.c.l.s4 1934713408
        %v922 = vunpack.c.0.s8 %v921
        %v923 = vlaneseq
        %v924 = vshrl.u32 %v923, 7
        %v925 = vsub.s32 %v922, %v924
        %v926 = vrot.slane %v912, %v925
        %v927 = vcombine.high %v903, 0.0
        %v928 = vcombine.high %v910, 0.0
        %v929 = vcombine.high %v919, 0.0
        %v930 = vcombine.high %v926, 0.0
        %936 = vrot.lane.b32.xlu0 %v448, 16
        %v937 = vpop.permute.xlu0 %936
        %938 = vrot.lane.b32.xlu0 %v584, 16
        %v939 = vpop.permute.xlu0 %938
        %940 = vrot.lane.b32.xlu0 %v720, 16
        %v941 = vpop.permute.xlu0 %940
        %942 = vrot.lane.b32.xlu0 %v856, 16
        %v943 = vpop.permute.xlu0 %942
        %944 = vrot.lane.b32.xlu0 %v927, 16
        %v945 = vpop.permute.xlu0 %944
        %956 = vrot.lane.b32.xlu0 %v449, 32
        %v957 = vpop.permute.xlu0 %956
        %958 = vrot.lane.b32.xlu0 %v585, 32
        %v959 = vpop.permute.xlu0 %958
        %960 = vrot.lane.b32.xlu0 %v721, 32
        %v961 = vpop.permute.xlu0 %960
        %962 = vrot.lane.b32.xlu0 %v857, 32
        %v963 = vpop.permute.xlu0 %962
        %964 = vrot.lane.b32.xlu0 %v910, 32
        %v965 = vpop.permute.xlu0 %964
        %976 = vrot.lane.b32.xlu0 %v450, 48
        %v977 = vpop.permute.xlu0 %976
        %978 = vrot.lane.b32.xlu0 %v586, 48
        %v979 = vpop.permute.xlu0 %978
        %980 = vrot.lane.b32.xlu0 %v722, 48
        %v981 = vpop.permute.xlu0 %980
        %982 = vrot.lane.b32.xlu0 %v858, 48
        %v983 = vpop.permute.xlu0 %982
        %984 = vrot.lane.b32.xlu0 %v928, 48
        %v985 = vpop.permute.xlu0 %984
        %996 = vrot.lane.b32.xlu0 %v451, 64
        %v997 = vpop.permute.xlu0 %996
        %998 = vrot.lane.b32.xlu0 %v587, 64
        %v999 = vpop.permute.xlu0 %998
        %1000 = vrot.lane.b32.xlu0 %v723, 64
        %v1001 = vpop.permute.xlu0 %1000
        %1002 = vrot.lane.b32.xlu0 %v859, 64
        %v1003 = vpop.permute.xlu0 %1002
        %1004 = vrot.lane.b32.xlu0 %v919, 64
        %v1005 = vpop.permute.xlu0 %1004
        %1016 = vrot.lane.b32.xlu0 %v452, 80
        %v1017 = vpop.permute.xlu0 %1016
        %1018 = vrot.lane.b32.xlu0 %v588, 80
        %v1019 = vpop.permute.xlu0 %1018
        %1020 = vrot.lane.b32.xlu0 %v724, 80
        %v1021 = vpop.permute.xlu0 %1020
        %1022 = vrot.lane.b32.xlu0 %v860, 80
        %v1023 = vpop.permute.xlu0 %1022
        %1024 = vrot.lane.b32.xlu0 %v929, 80
        %v1025 = vpop.permute.xlu0 %1024
        %1036 = vrot.lane.b32.xlu0 %v453, 96
        %v1037 = vpop.permute.xlu0 %1036
        %1038 = vrot.lane.b32.xlu0 %v589, 96
        %v1039 = vpop.permute.xlu0 %1038
        %1040 = vrot.lane.b32.xlu0 %v725, 96
        %v1041 = vpop.permute.xlu0 %1040
        %1042 = vrot.lane.b32.xlu0 %v861, 96
        %v1043 = vpop.permute.xlu0 %1042
        %1044 = vrot.lane.b32.xlu0 %v926, 96
        %v1045 = vpop.permute.xlu0 %1044
        %1056 = vrot.lane.b32.xlu0 %v454, 112
        %v1057 = vpop.permute.xlu0 %1056
        %1058 = vrot.lane.b32.xlu0 %v590, 112
        %v1059 = vpop.permute.xlu0 %1058
        %1060 = vrot.lane.b32.xlu0 %v726, 112
        %v1061 = vpop.permute.xlu0 %1060
        %1062 = vrot.lane.b32.xlu0 %v862, 112
        %v1063 = vpop.permute.xlu0 %1062
        %1064 = vrot.lane.b32.xlu0 %v930, 112
        %v1065 = vpop.permute.xlu0 %1064
        %vm1071 = vcmask 130048
        %v1072 = vsel %vm1071, %v447, %v937
        %v1073 = vsel %vm1071, %v583, %v939
        %v1074 = vsel %vm1071, %v719, %v941
        %v1075 = vsel %vm1071, %v855, %v943
        %v1076 = vsel %vm1071, %v903, %v945
        %vm1077 = vcmask 261120
        %v1078 = vsel %vm1077, %v1072, %v957
        %v1079 = vsel %vm1077, %v1073, %v959
        %v1080 = vsel %vm1077, %v1074, %v961
        %v1081 = vsel %vm1077, %v1075, %v963
        %v1082 = vsel %vm1077, %v1076, %v965
        %vm1083 = vcmask 392192
        %v1084 = vsel %vm1083, %v1078, %v977
        %v1085 = vsel %vm1083, %v1079, %v979
        %v1086 = vsel %vm1083, %v1080, %v981
        %v1087 = vsel %vm1083, %v1081, %v983
        %v1088 = vsel %vm1083, %v1082, %v985
        %vm1089 = vcmask 523264
        %v1090 = vsel %vm1089, %v1084, %v997
        %v1091 = vsel %vm1089, %v1085, %v999
        %v1092 = vsel %vm1089, %v1086, %v1001
        %v1093 = vsel %vm1089, %v1087, %v1003
        %v1094 = vsel %vm1089, %v1088, %v1005
        %vm1095 = vcmask 654336
        %v1096 = vsel %vm1095, %v1090, %v1017
        %v1097 = vsel %vm1095, %v1091, %v1019
        %v1098 = vsel %vm1095, %v1092, %v1021
        %v1099 = vsel %vm1095, %v1093, %v1023
        %v1100 = vsel %vm1095, %v1094, %v1025
        %vm1101 = vcmask 785408
        %v1102 = vsel %vm1101, %v1096, %v1037
        %v1103 = vsel %vm1101, %v1097, %v1039
        %v1104 = vsel %vm1101, %v1098, %v1041
        %v1105 = vsel %vm1101, %v1099, %v1043
        %v1106 = vsel %vm1101, %v1100, %v1045
        %vm1107 = vcmask 916480
        %v1108 = vsel %vm1107, %v1102, %v1057
        %v1109 = vsel %vm1107, %v1103, %v1059
        %v1110 = vsel %vm1107, %v1104, %v1061
        %v1111 = vsel %vm1107, %v1105, %v1063
        %v1112 = vsel %vm1107, %v1106, %v1065
        %v1113 = vld [vmem:[%s1] sm:$0xff]
        %v1114 = vld [vmem:[%s2] sm:$0xff]
        %1116 = vset.pattern.permute.xlu0 0
        %1117 = vperm.xlu0 %1116, %v1114
        %v1118 = vpop.permute.xlu0 %1117
        %vm1120 = vcmask 293888
        %v1122 = vsel %vm1120, %v1113, 0
        %vm1124 = vcmask 1043456
        %v1126 = vsel %vm1124, %v1112, 0
        %1128 = vmatprep.subr.mxu0 0.0
        %1129 = vmatpush1.msra.mxu0 %v1108
        %1130 = vmatprep.subr.mxu0 0.0
        %1131 = vmatpush1.msra.mxu0 %v1109
        %1132 = vmatprep.subr.mxu0 0.0
        %1133 = vmatpush1.msra.mxu0 %v1110
        %1134 = vmatprep.subr.mxu0 0.0
        %1135 = vmatpush1.msra.mxu0 %v1111
        %1136 = vmatprep.subr.mxu0 0.0
        %1137 = vmatpush1.msra.mxu0 %v1126
        %1138 = vmatprep.subr.mxu0 0.0
        %1139 = vmatpush1.msra.mxu0 0.0
        %1140 = vmatprep.subr.mxu0 0.0
        %1141 = vmatpush1.msra.mxu0 0.0
        %1142 = vmatprep.subr.mxu0 0.0
        %1143 = vmatpush1.msra.mxu0 0.0
        %1144 = vmatprep.subr.mxu0 0.0
        %1145 = vmatpush1.msra.mxu0 0.0
        %1146 = vmatprep.subr.mxu0 0.0
        %1147 = vmatpush1.msra.mxu0 0.0
        %1148 = vmatprep.subr.mxu0 0.0
        %1149 = vmatpush1.msra.mxu0 0.0
        %1150 = vmatprep.subr.mxu0 0.0
        %1151 = vmatpush1.msra.mxu0 0.0
        %1152 = vmatprep.subr.mxu0 0.0
        %1153 = vmatpush1.msra.mxu0 0.0
        %1154 = vmatprep.subr.mxu0 0.0
        %1155 = vmatpush1.msra.mxu0 0.0
        %1156 = vmatprep.subr.mxu0 0.0
        %1157 = vmatpush1.msra.mxu0 0.0
        %1158 = vmatprep.subr.mxu0 0.0
        %1159 = vmatpush1.msra.mxu0 0.0
        %1160 = vmatprep.subr.mxu0 0.0
        %1161 = vmatpush1.msra.mxu0 0.0
        %1162 = vmatprep.subr.mxu0 0.0
        %1163 = vmatpush1.msra.mxu0 0.0
        %1164 = vmatprep.subr.mxu0 0.0
        %1165 = vmatpush1.msra.mxu0 0.0
        %1166 = vmatprep.subr.mxu0 0.0
        %1167 = vmatpush1.msra.mxu0 0.0
        %1168 = vmatprep.subr.mxu0 0.0
        %1169 = vmatpush1.msra.mxu0 0.0
        %1170 = vmatprep.subr.mxu0 0.0
        %1171 = vmatpush1.msra.mxu0 0.0
        %1172 = vmatprep.subr.mxu0 0.0
        %1173 = vmatpush1.msra.mxu0 0.0
        %1174 = vmatprep.subr.mxu0 0.0
        %1175 = vmatpush1.msra.mxu0 0.0
        %1176 = vmatprep.subr.mxu0 0.0
        %1177 = vmatpush1.msra.mxu0 0.0
        %1178 = vmatprep.subr.mxu0 0.0
        %1179 = vmatpush1.msra.mxu0 0.0
        %1180 = vmatprep.subr.mxu0 0.0
        %1181 = vmatpush1.msra.mxu0 0.0
        %1182 = vmatprep.subr.mxu0 0.0
        %1183 = vmatpush1.msra.mxu0 0.0
        %1184 = vmatprep.subr.mxu0 0.0
        %1185 = vmatpush1.msra.mxu0 0.0
        %1186 = vmatprep.subr.mxu0 0.0
        %1187 = vmatpush1.msra.mxu0 0.0
        %1188 = vmatprep.subr.mxu0 0.0
        %1189 = vmatpush1.msra.mxu0 0.0
        %1190 = vmatprep.subr.mxu0 0.0
        %1191 = vmatpush1.msra.mxu0 0.0
        %1192 = vmatprep.mubr.f32.mxu0 0.0
        %1193 = vmatmul.mubr.f32.gmra.mrb[0].mxu0 %v1122
        %v1194 = vpop.f32.mrb[0].mxu0
        %v1195 = vadd.f32 %v1118, %v1194
        %v1196 = vpop.f32.mrb[0].mxu0
        %1197 = vdwg.mxu0
        %v1198 = vand.u32 2147483647, %v1195
        %v1199 = vsub.f32 0.0, %v1198
        %v1200 = vmul.f32 %v1199, 1.442695
        %v1201 = vpow.pop %v1200
        %v1202 = vmul.f32 %v1201, %v1201
        %v1203 = vmul.f32 %v1201, 2.0
        %v1204 = vadd.f32 %v1203, 1.0
        %v1205 = vmul.f32 %v1202, 2.0
        %v1206 = vadd.f32 %v1204, %v1205
        %v1207 = vrcp.pop %v1206
        %v1208 = vmul.f32 %v1204, %v1207
        %v1209 = vadd.f32 %v1203, %v1202
        %v1210 = vadd.f32 %v1203, 2.0
        %v1211 = vadd.f32 %v1210, %v1202
        %v1212 = vrcp.pop %v1211
        %v1213 = vmul.f32 %v1209, %v1212
        %vm1214 = vcmp.ge.f32.partialorder %v1195, 0.0
        %v1215 = vsel %vm1214, %v1208, %v1213
        %v1216 = vmul.f32 %v1195, %v1215
        %1217 = vst [vmem:[%s187] sm:$0xff] %v1216
        %s1218 = sand.u32 %s111, 1
        %s1219 = scalar_lea.sflag [#allocation3], %s1218
        %s1220 = sand.u32 %s111, 1
        %s1221 = smul.addr %s1220, 8
        %s1222 = scalar_lea.vmem [#allocation2], %s1221
        // Predicated region
        $region33: #{tpu_custom_call.1} parent=31 // pred_check
          %p1223 = pneg %p121
        $region34: #{tpu_custom_call.1} parent=31 // pred_check_branch
          %1225 = sbr.rel (%p1223) target = $region36
        $region35: #{tpu_custom_call.1} parent=31 // pred_region
          %s1227 = ssub.s32 128, 128
          %1228 = vsyncadd %s1219, %s1227
          %s1229 = smul.addr %s21, 2
          %s1230 = sadd.s32 %s22, %s1229
          %s1231 = smul.addr %s1230, 128
          %s1232 = scalar_lea.hbm %s3, %s1231
          %s1234 = sshll.u32 %s1222, 4
          %s1235 = int_to_ptr.vmem [resolvable:$true] %s1234
          %1237 = dma.vmem_to_hbm [thread:$0]  %s1235, 128, %s1232, %s1219
        $region36: #{tpu_custom_call.1} parent=31 // pred_fallthru
          _
      $region32: #{tpu_custom_call.1} parent=5 // pred_fallthru
        _
      %p1238 = scmp.le.s32.totalorder 2, %s12
      // Predicated region
      $region37: #{tpu_custom_call.1} parent=5 // pred_check
        %p1239 = pneg %p1238
      $region38: #{tpu_custom_call.1} parent=5 // pred_check_branch
        %1241 = sbr.rel (%p1239) target = $region40
      $region39: #{tpu_custom_call.1} parent=5 // pred_region
        %s1242 = ssub.s32 %s12, 2
        // Predicated region
        $region41: #{tpu_custom_call.1} parent=39 // pred_check
          %p1243 = pneg %p127
        $region42: #{tpu_custom_call.1} parent=39 // pred_check_branch
          %1245 = sbr.rel (%p1243) target = $region44
        $region43: #{tpu_custom_call.1} parent=39 // pred_region
          %s1246 = sand.u32 %s112, 1
          %s1247 = scalar_lea.sflag [#allocation3], %s1246
          %s1248 = sand.u32 %s112, 1
          %s1249 = smul.addr %s1248, 8
          %s1250 = scalar_lea.vmem [#allocation2], %s1249
          %1251 = dma.done %s1247, 128
        $region44: #{tpu_custom_call.1} parent=39 // pred_fallthru
          _
      $region40: #{tpu_custom_call.1} parent=5 // pred_fallthru
        _
    $region6: #{tpu_custom_call.1} parent=1 // loop_footer
      %s16 = sadd.s32 1, %s12
    $region7: #{tpu_custom_call.1} parent=1 // loop_footer_branch
      %11 = sbr.rel target = $region3
    $region8: #{tpu_custom_call.1} parent=1 // loop_exit
      _
    %1252 = vsyncpa [#allocation3], 1
    %s1253 = scalar_lea.sflag [#allocation3], 1
    %1254 = vsyncpa %s1253, 1

</llo_original>
